<compile_context>
chip_gen: v7x
topology: tpu7x:2x2x1
jax: 0.10.0
libtpu: 0.0.40
codegen_flags: <defaults>
</compile_context>

<pallas_src>
import functools

import jax
import jax.numpy as jnp
from jax.experimental import pallas as pl
from jax.experimental.pallas import tpu as pltpu

LOG_STD_MIN = -10.0
LOG_STD_MAX = 2.0
LN_EPS = 1e-5  # PyTorch nn.LayerNorm default


def _round_up(x, m):
    return ((x + m - 1) // m) * m


# ----------------------------------------------------------------------------
# Fused kernel
# ----------------------------------------------------------------------------
def _fused_actor_kernel(layer_dims, action_dim, use_bf16, x_ref, *refs):
    """(Linear+LN+ReLU) x N layers, then a single fused lane-dense head matmul.

    refs layout:
      [ w_0, ..., w_{N-1},            # per-layer weights, (in, out)
        w_head,                       # fused head weight, (last_hidden, head_w) zero-padded
        vec_slab,                     # (8*N+8, d_max): rows 8i..8i+2 = (b, gamma, beta)
                                      # of layer i; row 8N = fused head bias
        out ]                         # (tb, head_w): [mean | log_std | 0-pad]
    """
    n = len(layer_dims)
    w_refs = refs[:n]
    w_head_ref = refs[n]
    vec_ref = refs[n + 1]
    out_ref = refs[n + 2]

    def mm(a, b):
        if use_bf16:
            a = a.astype(jnp.bfloat16)
            b = b.astype(jnp.bfloat16)
        return jnp.dot(a, b, preferred_element_type=jnp.float32)

    h = x_ref[...].astype(jnp.float32)
    for i, d in enumerate(layer_dims):
        w = w_refs[i][...]
        b = vec_ref[8 * i + 0:8 * i + 1, 0:d]       # (1, d)
        g = vec_ref[8 * i + 1:8 * i + 2, 0:d]       # (1, d)
        beta = vec_ref[8 * i + 2:8 * i + 3, 0:d]    # (1, d)

        # Linear (MXU) + bias
        h = mm(h, w) + b
        # LayerNorm: two independent reductions (E[x], E[x^2]) -> overlap on XLU
        mu = jnp.mean(h, axis=-1, keepdims=True)
        ms = jnp.mean(h * h, axis=-1, keepdims=True)
        var = jnp.maximum(ms - mu * mu, 0.0)
        h = (h - mu) * jax.lax.rsqrt(var + LN_EPS) * g + beta
        # ReLU
        h = jnp.maximum(h, 0.0)

    # Fused head: columns [0:A) = mean, [A:2A) = log_std, rest zero padding.
    head_w = out_ref.shape[-1]
    bh = vec_ref[8 * n:8 * n + 1, 0:head_w]
    r = mm(h, w_head_ref[...]) + bh

    col = jax.lax.broadcasted_iota(jnp.int32, r.shape, 1)
    is_logstd = (col >= action_dim) & (col < 2 * action_dim)
    r = jnp.where(is_logstd, jnp.clip(r, LOG_STD_MIN, LOG_STD_MAX), r)

    out_ref[...] = r  # single unmasked, lane-dense (tb, 128) store


# ----------------------------------------------------------------------------
# One-time parameter packing (do this once, outside the per-step call).
# ----------------------------------------------------------------------------
def pack_params(params):
    """params = {'ln_layers': [(w, b, gamma, beta), ...], 'mean': (w, b), 'log_std': (w, b)}"""
    layer_dims = tuple(int(w.shape[1]) for (w, _, _, _) in params["ln_layers"])
    n = len(layer_dims)
    action_dim = int(params["mean"][0].shape[1])
    last_hidden = layer_dims[-1]

    head_w = max(128, _round_up(2 * action_dim, 128))  # lane-dense padded head width
    d_max = max(list(layer_dims) + [head_w])

    ws = [w.astype(jnp.float32) for (w, _, _, _) in params["ln_layers"]]

    # Fused, zero-padded head weight: [w_mean | w_logstd | 0]
    w_head = jnp.zeros((last_hidden, head_w), jnp.float32)
    w_head = w_head.at[:, :action_dim].set(params["mean"][0])
    w_head = w_head.at[:, action_dim:2 * action_dim].set(params["log_std"][0])

    # Single slab for all small vectors (sublane-aligned: 8 rows per layer).
    slab = jnp.zeros((8 * n + 8, d_max), jnp.float32)
    for i, (_, b, g, beta) in enumerate(params["ln_layers"]):
        d = layer_dims[i]
        slab = slab.at[8 * i + 0, :d].set(b)
        slab = slab.at[8 * i + 1, :d].set(g)
        slab = slab.at[8 * i + 2, :d].set(beta)
    slab = slab.at[8 * n, :action_dim].set(params["mean"][1])
    slab = slab.at[8 * n, action_dim:2 * action_dim].set(params["log_std"][1])

    return {
        "ws": ws,
        "w_head": w_head,
        "vec_slab": slab,
        "layer_dims": layer_dims,
        "action_dim": action_dim,
        "head_w": head_w,
    }


# ----------------------------------------------------------------------------
# Wrapper: 1-D batch grid, resident weights, lane-dense padded output.
# ----------------------------------------------------------------------------
def shared_trunk_actor_forward(x, packed, *, block_batch=256, use_bf16_matmul=False):
    batch, in_dim = x.shape
    layer_dims = packed["layer_dims"]
    action_dim = packed["action_dim"]
    head_w = packed["head_w"]
    ws = packed["ws"]

    # Batch tile: multiple of 8 sublanes, capped at block_batch (sized well under
    # the v7x 32 MiB scoped-VMEM default even with double-buffering).
    tb = min(block_batch, _round_up(batch, 8))
    tb = _round_up(tb, 8)
    padded_batch = _round_up(batch, tb)
    if padded_batch != batch:
        x = jnp.pad(x, ((0, padded_batch - batch), (0, 0)))
    grid = (padded_batch // tb,)

    kernel = functools.partial(
        _fused_actor_kernel, layer_dims, action_dim, use_bf16_matmul)

    in_specs = (
        [pl.BlockSpec((tb, in_dim), lambda i: (i, 0))]                     # activations: pipelined
        + [pl.BlockSpec(w.shape, lambda i: (0, 0)) for w in ws]            # weights: resident
        + [pl.BlockSpec(packed["w_head"].shape, lambda i: (0, 0)),
           pl.BlockSpec(packed["vec_slab"].shape, lambda i: (0, 0))]
    )
    out_spec = pl.BlockSpec((tb, head_w), lambda i: (i, 0))

    out = pl.pallas_call(
        kernel,
        out_shape=jax.ShapeDtypeStruct((padded_batch, head_w), jnp.float32),
        grid_spec=pltpu.PrefetchScalarGridSpec(
            num_scalar_prefetch=0,
            grid=grid,
            in_specs=in_specs,
            out_specs=out_spec,
        ),
        compiler_params=pltpu.CompilerParams(
            dimension_semantics=("parallel",),   # megacore split on v7x
        ),
    )(x, *ws, packed["w_head"], packed["vec_slab"])

    out = out[:batch]
    mean = out[:, :action_dim]
    log_std = out[:, action_dim:2 * action_dim]
    return mean, log_std


# ----------------------------------------------------------------------------
# Deterministic parameter construction (PyTorch-default-like uniform init).
# ----------------------------------------------------------------------------
def _linear_params(key, in_dim, out_dim):
    kw, kb = jax.random.split(key)
    bound = 1.0 / jnp.sqrt(float(in_dim))
    w = jax.random.uniform(kw, (in_dim, out_dim), jnp.float32, -bound, bound)
    b = jax.random.uniform(kb, (out_dim,), jnp.float32, -bound, bound)
    return w, b


def build_params(key, input_dim, trunk_dim, hidden_dims, action_dim):
    # TODO(synk): the shared `trunk_network` in the original module is an
    # arbitrary nn.Module; it is modeled here as a single Linear->LN->ReLU
    # layer producing trunk_dim features.
    ln_layers = []
    prev = input_dim
    dims = [trunk_dim] + list(hidden_dims)   # trunk layer, then actor hidden layers
    for d in dims:
        key, sub = jax.random.split(key)
        w, b = _linear_params(sub, prev, d)
        gamma = jnp.ones((d,), jnp.float32)
        beta = jnp.zeros((d,), jnp.float32)
        ln_layers.append((w, b, gamma, beta))
        prev = d
    key, km, ks = jax.random.split(key, 3)
    mean_p = _linear_params(km, prev, action_dim)
    logstd_p = _linear_params(ks, prev, action_dim)
    return {"ln_layers": ln_layers, "mean": mean_p, "log_std": logstd_p}


# ----------------------------------------------------------------------------
# Pure-JAX reference (mirrors the PyTorch forward) for correctness checks.
# ----------------------------------------------------------------------------
def reference_forward(x, params):
    h = x.astype(jnp.float32)
    for (w, b, g, beta) in params["ln_layers"]:
        h = h @ w + b
        mu = jnp.mean(h, axis=-1, keepdims=True)
        var = jnp.mean((h - mu) ** 2, axis=-1, keepdims=True)
        h = (h - mu) / jnp.sqrt(var + LN_EPS) * g + beta
        h = jnp.maximum(h, 0.0)
    mean = h @ params["mean"][0] + params["mean"][1]
    log_std = h @ params["log_std"][0] + params["log_std"][1]
    log_std = jnp.clip(log_std, LOG_STD_MIN, LOG_STD_MAX)
    return mean, log_std


if __name__ == "__main__":
    # Small shapes consistent with the module's forward.
    batch, input_dim = 8, 32
    trunk_dim = 128
    hidden_dims = [128, 64]
    action_dim = 4

    key = jax.random.PRNGKey(0)
    key, kx, kp = jax.random.split(key, 3)
    x = jax.random.normal(kx, (batch, input_dim), jnp.float32)
    params = build_params(kp, input_dim, trunk_dim, hidden_dims, action_dim)
    packed = pack_params(params)

    mean, log_std = shared_trunk_actor_forward(x, packed)
    jax.block_until_ready((mean, log_std))

    ref_mean, ref_log_std = reference_forward(x, params)
    assert mean.shape == (batch, action_dim) and log_std.shape == (batch, action_dim)
    assert jnp.allclose(mean, ref_mean, atol=1e-4, rtol=1e-4)
    assert jnp.allclose(log_std, ref_log_std, atol=1e-4, rtol=1e-4)

    # Exercise the multi-block grid + batch-padding path (grid = 3 steps).
    x2 = jax.random.normal(jax.random.PRNGKey(1), (44, input_dim), jnp.float32)
    m2, s2 = shared_trunk_actor_forward(x2, packed, block_batch=16)
    jax.block_until_ready((m2, s2))
    rm2, rs2 = reference_forward(x2, params)
    assert m2.shape == (44, action_dim) and s2.shape == (44, action_dim)
    assert jnp.allclose(m2, rm2, atol=1e-4, rtol=1e-4)
    assert jnp.allclose(s2, rs2, atol=1e-4, rtol=1e-4)

    print("KERNEL_OK")
</pallas_src>

<mosaic_0001>
module attributes {stable_mosaic.version = 11 : i64} {
  func.func @_fused_actor_kernel(%arg0: i32, %arg1: memref<8x32xf32, #tpu.memory_space<vmem>>, %arg2: memref<32x128xf32, #tpu.memory_space<vmem>>, %arg3: memref<128x128xf32, #tpu.memory_space<vmem>>, %arg4: memref<128x64xf32, #tpu.memory_space<vmem>>, %arg5: memref<64x128xf32, #tpu.memory_space<vmem>>, %arg6: memref<32x128xf32, #tpu.memory_space<vmem>>, %arg7: memref<8x128xf32, #tpu.memory_space<vmem>>) attributes {dimension_semantics = [#tpu.dimension_semantics<parallel>], iteration_bounds = array<i64: 1>, scalar_prefetch = 0 : i64, scratch_operands = 0 : i64, tpu.core_type = #tpu.core_type<tc>, window_params = [{transform_indices = @transform_0, window_bounds = array<i64: 8, 32>}, {pipeline_mode = #tpu.pipeline_mode<synchronous>, transform_indices = @transform_1, window_bounds = array<i64: 32, 128>}, {pipeline_mode = #tpu.pipeline_mode<synchronous>, transform_indices = @transform_2, window_bounds = array<i64: 128, 128>}, {pipeline_mode = #tpu.pipeline_mode<synchronous>, transform_indices = @transform_3, window_bounds = array<i64: 128, 64>}, {pipeline_mode = #tpu.pipeline_mode<synchronous>, transform_indices = @transform_4, window_bounds = array<i64: 64, 128>}, {pipeline_mode = #tpu.pipeline_mode<synchronous>, transform_indices = @transform_5, window_bounds = array<i64: 32, 128>}, {transform_indices = @transform_6, window_bounds = array<i64: 8, 128>}]} {
    %c0 = arith.constant 0 : index
    %c0_0 = arith.constant 0 : index
    %0 = vector.load %arg1[%c0, %c0_0] : memref<8x32xf32, #tpu.memory_space<vmem>>, vector<8x32xf32>
    %c0_1 = arith.constant 0 : index
    %c0_2 = arith.constant 0 : index
    %1 = vector.load %arg2[%c0_1, %c0_2] : memref<32x128xf32, #tpu.memory_space<vmem>>, vector<32x128xf32>
    %c0_3 = arith.constant 0 : index
    %c0_4 = arith.constant 0 : index
    %2 = vector.load %arg6[%c0_3, %c0_4] : memref<32x128xf32, #tpu.memory_space<vmem>>, vector<1x128xf32>
    %c1 = arith.constant 1 : index
    %c0_5 = arith.constant 0 : index
    %3 = vector.load %arg6[%c1, %c0_5] : memref<32x128xf32, #tpu.memory_space<vmem>>, vector<1x128xf32>
    %c2 = arith.constant 2 : index
    %c0_6 = arith.constant 0 : index
    %4 = vector.load %arg6[%c2, %c0_6] : memref<32x128xf32, #tpu.memory_space<vmem>>, vector<1x128xf32>
    %cst = arith.constant dense<0.000000e+00> : vector<8x128xf32>
    %5 = tpu.matmul %0, %1, %cst {dimension_numbers = #tpu.dot_dimension_numbers<[1], [0], [0], [1], [0, 0, 1, 1], [], []>} : vector<8x32xf32>, vector<32x128xf32>, vector<8x128xf32> -> vector<8x128xf32>
    %6 = vector.broadcast %2 : vector<1x128xf32> to vector<8x128xf32>
    %7 = arith.addf %5, %6 : vector<8x128xf32>
    %cst_7 = arith.constant dense<0.000000e+00> : vector<8xf32>
    %8 = vector.multi_reduction <add>, %7, %cst_7 [1] : vector<8x128xf32> to vector<8xf32>
    %9 = vector.shape_cast %8 : vector<8xf32> to vector<8x1xf32>
    %cst_8 = arith.constant 1.280000e+02 : f32
    %10 = vector.broadcast %cst_8 : f32 to vector<8x1xf32>
    %11 = arith.divf %9, %10 : vector<8x1xf32>
    %12 = arith.mulf %7, %7 : vector<8x128xf32>
    %cst_9 = arith.constant dense<0.000000e+00> : vector<8xf32>
    %13 = vector.multi_reduction <add>, %12, %cst_9 [1] : vector<8x128xf32> to vector<8xf32>
    %14 = vector.shape_cast %13 : vector<8xf32> to vector<8x1xf32>
    %cst_10 = arith.constant 1.280000e+02 : f32
    %15 = vector.broadcast %cst_10 : f32 to vector<8x1xf32>
    %16 = arith.divf %14, %15 : vector<8x1xf32>
    %17 = arith.mulf %11, %11 : vector<8x1xf32>
    %18 = arith.subf %16, %17 : vector<8x1xf32>
    %cst_11 = arith.constant 0.000000e+00 : f32
    %19 = vector.broadcast %cst_11 : f32 to vector<8x1xf32>
    %20 = arith.maximumf %18, %19 : vector<8x1xf32>
    %21 = vector.broadcast %11 : vector<8x1xf32> to vector<8x128xf32>
    %22 = arith.subf %7, %21 : vector<8x128xf32>
    %cst_12 = arith.constant 9.99999974E-6 : f32
    %23 = vector.broadcast %cst_12 : f32 to vector<8x1xf32>
    %24 = arith.addf %20, %23 : vector<8x1xf32>
    %25 = math.rsqrt %24 : vector<8x1xf32>
    %26 = vector.broadcast %25 : vector<8x1xf32> to vector<8x128xf32>
    %27 = arith.mulf %22, %26 : vector<8x128xf32>
    %28 = vector.broadcast %3 : vector<1x128xf32> to vector<8x128xf32>
    %29 = arith.mulf %27, %28 : vector<8x128xf32>
    %30 = vector.broadcast %4 : vector<1x128xf32> to vector<8x128xf32>
    %31 = arith.addf %29, %30 : vector<8x128xf32>
    %cst_13 = arith.constant 0.000000e+00 : f32
    %32 = vector.broadcast %cst_13 : f32 to vector<8x128xf32>
    %33 = arith.maximumf %31, %32 : vector<8x128xf32>
    %c0_14 = arith.constant 0 : index
    %c0_15 = arith.constant 0 : index
    %34 = vector.load %arg3[%c0_14, %c0_15] : memref<128x128xf32, #tpu.memory_space<vmem>>, vector<128x128xf32>
    %c8 = arith.constant 8 : index
    %c0_16 = arith.constant 0 : index
    %35 = vector.load %arg6[%c8, %c0_16] : memref<32x128xf32, #tpu.memory_space<vmem>>, vector<1x128xf32>
    %c9 = arith.constant 9 : index
    %c0_17 = arith.constant 0 : index
    %36 = vector.load %arg6[%c9, %c0_17] : memref<32x128xf32, #tpu.memory_space<vmem>>, vector<1x128xf32>
    %c10 = arith.constant 10 : index
    %c0_18 = arith.constant 0 : index
    %37 = vector.load %arg6[%c10, %c0_18] : memref<32x128xf32, #tpu.memory_space<vmem>>, vector<1x128xf32>
    %cst_19 = arith.constant dense<0.000000e+00> : vector<8x128xf32>
    %38 = tpu.matmul %33, %34, %cst_19 {dimension_numbers = #tpu.dot_dimension_numbers<[1], [0], [0], [1], [0, 0, 1, 1], [], []>} : vector<8x128xf32>, vector<128x128xf32>, vector<8x128xf32> -> vector<8x128xf32>
    %39 = vector.broadcast %35 : vector<1x128xf32> to vector<8x128xf32>
    %40 = arith.addf %38, %39 : vector<8x128xf32>
    %cst_20 = arith.constant dense<0.000000e+00> : vector<8xf32>
    %41 = vector.multi_reduction <add>, %40, %cst_20 [1] : vector<8x128xf32> to vector<8xf32>
    %42 = vector.shape_cast %41 : vector<8xf32> to vector<8x1xf32>
    %cst_21 = arith.constant 1.280000e+02 : f32
    %43 = vector.broadcast %cst_21 : f32 to vector<8x1xf32>
    %44 = arith.divf %42, %43 : vector<8x1xf32>
    %45 = arith.mulf %40, %40 : vector<8x128xf32>
    %cst_22 = arith.constant dense<0.000000e+00> : vector<8xf32>
    %46 = vector.multi_reduction <add>, %45, %cst_22 [1] : vector<8x128xf32> to vector<8xf32>
    %47 = vector.shape_cast %46 : vector<8xf32> to vector<8x1xf32>
    %cst_23 = arith.constant 1.280000e+02 : f32
    %48 = vector.broadcast %cst_23 : f32 to vector<8x1xf32>
    %49 = arith.divf %47, %48 : vector<8x1xf32>
    %50 = arith.mulf %44, %44 : vector<8x1xf32>
    %51 = arith.subf %49, %50 : vector<8x1xf32>
    %cst_24 = arith.constant 0.000000e+00 : f32
    %52 = vector.broadcast %cst_24 : f32 to vector<8x1xf32>
    %53 = arith.maximumf %51, %52 : vector<8x1xf32>
    %54 = vector.broadcast %44 : vector<8x1xf32> to vector<8x128xf32>
    %55 = arith.subf %40, %54 : vector<8x128xf32>
    %cst_25 = arith.constant 9.99999974E-6 : f32
    %56 = vector.broadcast %cst_25 : f32 to vector<8x1xf32>
    %57 = arith.addf %53, %56 : vector<8x1xf32>
    %58 = math.rsqrt %57 : vector<8x1xf32>
    %59 = vector.broadcast %58 : vector<8x1xf32> to vector<8x128xf32>
    %60 = arith.mulf %55, %59 : vector<8x128xf32>
    %61 = vector.broadcast %36 : vector<1x128xf32> to vector<8x128xf32>
    %62 = arith.mulf %60, %61 : vector<8x128xf32>
    %63 = vector.broadcast %37 : vector<1x128xf32> to vector<8x128xf32>
    %64 = arith.addf %62, %63 : vector<8x128xf32>
    %cst_26 = arith.constant 0.000000e+00 : f32
    %65 = vector.broadcast %cst_26 : f32 to vector<8x128xf32>
    %66 = arith.maximumf %64, %65 : vector<8x128xf32>
    %c0_27 = arith.constant 0 : index
    %c0_28 = arith.constant 0 : index
    %67 = vector.load %arg4[%c0_27, %c0_28] : memref<128x64xf32, #tpu.memory_space<vmem>>, vector<128x64xf32>
    %c16 = arith.constant 16 : index
    %c0_29 = arith.constant 0 : index
    %68 = vector.load %arg6[%c16, %c0_29] : memref<32x128xf32, #tpu.memory_space<vmem>>, vector<1x64xf32>
    %c17 = arith.constant 17 : index
    %c0_30 = arith.constant 0 : index
    %69 = vector.load %arg6[%c17, %c0_30] : memref<32x128xf32, #tpu.memory_space<vmem>>, vector<1x64xf32>
    %c18 = arith.constant 18 : index
    %c0_31 = arith.constant 0 : index
    %70 = vector.load %arg6[%c18, %c0_31] : memref<32x128xf32, #tpu.memory_space<vmem>>, vector<1x64xf32>
    %cst_32 = arith.constant dense<0.000000e+00> : vector<8x64xf32>
    %71 = tpu.matmul %66, %67, %cst_32 {dimension_numbers = #tpu.dot_dimension_numbers<[1], [0], [0], [1], [0, 0, 1, 1], [], []>} : vector<8x128xf32>, vector<128x64xf32>, vector<8x64xf32> -> vector<8x64xf32>
    %72 = vector.broadcast %68 : vector<1x64xf32> to vector<8x64xf32>
    %73 = arith.addf %71, %72 : vector<8x64xf32>
    %cst_33 = arith.constant dense<0.000000e+00> : vector<8xf32>
    %74 = vector.multi_reduction <add>, %73, %cst_33 [1] : vector<8x64xf32> to vector<8xf32>
    %75 = vector.shape_cast %74 : vector<8xf32> to vector<8x1xf32>
    %cst_34 = arith.constant 6.400000e+01 : f32
    %76 = vector.broadcast %cst_34 : f32 to vector<8x1xf32>
    %77 = arith.divf %75, %76 : vector<8x1xf32>
    %78 = arith.mulf %73, %73 : vector<8x64xf32>
    %cst_35 = arith.constant dense<0.000000e+00> : vector<8xf32>
    %79 = vector.multi_reduction <add>, %78, %cst_35 [1] : vector<8x64xf32> to vector<8xf32>
    %80 = vector.shape_cast %79 : vector<8xf32> to vector<8x1xf32>
    %cst_36 = arith.constant 6.400000e+01 : f32
    %81 = vector.broadcast %cst_36 : f32 to vector<8x1xf32>
    %82 = arith.divf %80, %81 : vector<8x1xf32>
    %83 = arith.mulf %77, %77 : vector<8x1xf32>
    %84 = arith.subf %82, %83 : vector<8x1xf32>
    %cst_37 = arith.constant 0.000000e+00 : f32
    %85 = vector.broadcast %cst_37 : f32 to vector<8x1xf32>
    %86 = arith.maximumf %84, %85 : vector<8x1xf32>
    %87 = vector.broadcast %77 : vector<8x1xf32> to vector<8x64xf32>
    %88 = arith.subf %73, %87 : vector<8x64xf32>
    %cst_38 = arith.constant 9.99999974E-6 : f32
    %89 = vector.broadcast %cst_38 : f32 to vector<8x1xf32>
    %90 = arith.addf %86, %89 : vector<8x1xf32>
    %91 = math.rsqrt %90 : vector<8x1xf32>
    %92 = vector.broadcast %91 : vector<8x1xf32> to vector<8x64xf32>
    %93 = arith.mulf %88, %92 : vector<8x64xf32>
    %94 = vector.broadcast %69 : vector<1x64xf32> to vector<8x64xf32>
    %95 = arith.mulf %93, %94 : vector<8x64xf32>
    %96 = vector.broadcast %70 : vector<1x64xf32> to vector<8x64xf32>
    %97 = arith.addf %95, %96 : vector<8x64xf32>
    %cst_39 = arith.constant 0.000000e+00 : f32
    %98 = vector.broadcast %cst_39 : f32 to vector<8x64xf32>
    %99 = arith.maximumf %97, %98 : vector<8x64xf32>
    %c24 = arith.constant 24 : index
    %c0_40 = arith.constant 0 : index
    %100 = vector.load %arg6[%c24, %c0_40] : memref<32x128xf32, #tpu.memory_space<vmem>>, vector<1x128xf32>
    %c0_41 = arith.constant 0 : index
    %c0_42 = arith.constant 0 : index
    %101 = vector.load %arg5[%c0_41, %c0_42] : memref<64x128xf32, #tpu.memory_space<vmem>>, vector<64x128xf32>
    %cst_43 = arith.constant dense<0.000000e+00> : vector<8x128xf32>
    %102 = tpu.matmul %99, %101, %cst_43 {dimension_numbers = #tpu.dot_dimension_numbers<[1], [0], [0], [1], [0, 0, 1, 1], [], []>} : vector<8x64xf32>, vector<64x128xf32>, vector<8x128xf32> -> vector<8x128xf32>
    %103 = vector.broadcast %100 : vector<1x128xf32> to vector<8x128xf32>
    %104 = arith.addf %102, %103 : vector<8x128xf32>
    %105 = tpu.iota {dimensions = array<i32: 1>} : vector<8x128xi32>
    %c4_i32 = arith.constant 4 : i32
    %106 = vector.broadcast %c4_i32 : i32 to vector<8x128xi32>
    %107 = arith.cmpi sge, %105, %106 : vector<8x128xi32>
    %c8_i32 = arith.constant 8 : i32
    %108 = vector.broadcast %c8_i32 : i32 to vector<8x128xi32>
    %109 = arith.cmpi slt, %105, %108 : vector<8x128xi32>
    %110 = arith.andi %107, %109 : vector<8x128xi1>
    %cst_44 = arith.constant -1.000000e+01 : f32
    %cst_45 = arith.constant 2.000000e+00 : f32
    %111 = vector.broadcast %cst_44 : f32 to vector<8x128xf32>
    %112 = arith.maximumf %111, %104 : vector<8x128xf32>
    %113 = vector.broadcast %cst_45 : f32 to vector<8x128xf32>
    %114 = arith.minimumf %113, %112 : vector<8x128xf32>
    %115 = arith.select %110, %114, %104 : vector<8x128xi1>, vector<8x128xf32>
    %c0_46 = arith.constant 0 : index
    %c0_47 = arith.constant 0 : index
    %116 = vector.load %arg7[%c0_46, %c0_47] : memref<8x128xf32, #tpu.memory_space<vmem>>, vector<8x128xf32>
    tpu.vector_store %arg7[%c0_46, %c0_47], %115 {strides = array<i32>} : memref<8x128xf32, #tpu.memory_space<vmem>>, vector<8x128xf32>,
    return
  }
  func.func @transform_0(%arg0: i32) -> (i32, i32) {
    %c0_i32 = arith.constant 0 : i32
    %c0_i32_0 = arith.constant 0 : i32
    return %arg0, %c0_i32 : i32, i32
  }
  func.func @transform_1(%arg0: i32) -> (i32, i32) {
    %c0_i32 = arith.constant 0 : i32
    %c0_i32_0 = arith.constant 0 : i32
    %c0_i32_1 = arith.constant 0 : i32
    return %c0_i32, %c0_i32_0 : i32, i32
  }
  func.func @transform_2(%arg0: i32) -> (i32, i32) {
    %c0_i32 = arith.constant 0 : i32
    %c0_i32_0 = arith.constant 0 : i32
    %c0_i32_1 = arith.constant 0 : i32
    return %c0_i32, %c0_i32_0 : i32, i32
  }
  func.func @transform_3(%arg0: i32) -> (i32, i32) {
    %c0_i32 = arith.constant 0 : i32
    %c0_i32_0 = arith.constant 0 : i32
    %c0_i32_1 = arith.constant 0 : i32
    return %c0_i32, %c0_i32_0 : i32, i32
  }
  func.func @transform_4(%arg0: i32) -> (i32, i32) {
    %c0_i32 = arith.constant 0 : i32
    %c0_i32_0 = arith.constant 0 : i32
    %c0_i32_1 = arith.constant 0 : i32
    return %c0_i32, %c0_i32_0 : i32, i32
  }
  func.func @transform_5(%arg0: i32) -> (i32, i32) {
    %c0_i32 = arith.constant 0 : i32
    %c0_i32_0 = arith.constant 0 : i32
    %c0_i32_1 = arith.constant 0 : i32
    return %c0_i32, %c0_i32_0 : i32, i32
  }
  func.func @transform_6(%arg0: i32) -> (i32, i32) {
    %c0_i32 = arith.constant 0 : i32
    %c0_i32_0 = arith.constant 0 : i32
    return %arg0, %c0_i32 : i32, i32
  }
}

</mosaic_0001>

<llo_original>
// kernel: tpu_custom_call.1
$region0: #{tpu_custom_call.1}
  #allocation0 [shape = 'u32[]', space=smem, size = 0x4, offset = 0x4, fixed_abs, tag = 'smem constant byte address 0x4 - core index']
  #allocation1 [shape = 'u32[144,128]{1,0:T(1,128)}', space=vmem, size = 0x12000, scoped, tag = 'internal scratch']
  %s0 = inlined_call_operand.hbm [shape: f32[8,32], index: 0, kind: input, shape index: {}]
  %s1 = inlined_call_operand.hbm [shape: f32[32,128], index: 1, kind: input, shape index: {}]
  %s2 = inlined_call_operand.vmem [shape: f32[128,128], index: 2, kind: input, shape index: {}]
  %s3 = inlined_call_operand.vmem [shape: f32[128,64], index: 3, kind: input, shape index: {}]
  %s4 = inlined_call_operand.vmem [shape: f32[64,128], index: 4, kind: input, shape index: {}]
  %s5 = inlined_call_operand.hbm [shape: f32[32,128], index: 5, kind: input, shape index: {}]
  %s6 = inlined_call_operand.hbm [shape: f32[8,128], index: 6, kind: output, shape index: {}]
  %s7 = sld [smem:[#allocation0]]
  $region46: #{tpu_custom_call.1} parent=0
    _
  %s9 = ssub.s32 1, %s7
  %s10 = scalar_select 0, %s9, %s7
  $region1: #{tpu_custom_call.1} parent=0
    #allocation2 [shape = 'u8[4096]{0}', space=vmem, size = 0x1000, scoped, tag = 'input window, operand 0, single buffered']
    #allocation3 [shape = 's32[1]{0}', space=sflag, size = 0x4, scoped, tag = 'scoped memory for tpu_custom_call.1']
    #allocation4 [shape = 's32[1]{0}', space=sflag, size = 0x4, scoped, tag = 'scoped memory for tpu_custom_call.1']
    #allocation5 [shape = 'u8[16384]{0}', space=vmem, size = 0x4000, scoped, tag = 'input window, operand 1, single buffered']
    #allocation6 [shape = 's32[1]{0}', space=sflag, size = 0x4, scoped, tag = 'scoped memory for tpu_custom_call.1']
    #allocation7 [shape = 'u8[16384]{0}', space=vmem, size = 0x4000, scoped, tag = 'input window, operand 5, single buffered']
    #allocation8 [shape = 'u8[4096]{0}', space=vmem, size = 0x1000, scoped, tag = 'output window, operand 0, single buffered']
    %11 = vsyncpa [#allocation3], 0
    %12 = vsyncpa [#allocation6], 0
    %13 = vsyncpa [#allocation4], 0
    // Predicated region
    $region2: #{tpu_custom_call.1} parent=1 // pred_check
      _
    $region3: #{tpu_custom_call.1} parent=1 // pred_check_branch
      %15 = sbr.rel (0) target = $region5
    $region4: #{tpu_custom_call.1} parent=1 // pred_region
      %s17 = ssub.s32 128, 128
      %18 = vsyncadd [#allocation3], %s17
      %s20 = sshll.u32 [#allocation2], 4
      %s21 = int_to_ptr.vmem [resolvable:$true] %s20
      %23 = dma.hbm_to_vmem [thread:$0]  %s0, 128, %s21, [#allocation3]
    $region5: #{tpu_custom_call.1} parent=1 // pred_fallthru
      _
    // Predicated region
    $region6: #{tpu_custom_call.1} parent=1 // pred_check
      _
    $region7: #{tpu_custom_call.1} parent=1 // pred_check_branch
      %25 = sbr.rel (0) target = $region9
    $region8: #{tpu_custom_call.1} parent=1 // pred_region
      %s27 = ssub.s32 512, 512
      %28 = vsyncadd [#allocation6], %s27
      %s29 = sshll.u32 [#allocation5], 4
      %s30 = int_to_ptr.vmem [resolvable:$true] %s29
      %35 = dma.hbm_to_vmem [thread:$0]  %s1, 512, %s30, [#allocation6], 128, 128, 8
    $region9: #{tpu_custom_call.1} parent=1 // pred_fallthru
      _
    // Predicated region
    $region10: #{tpu_custom_call.1} parent=1 // pred_check
      _
    $region11: #{tpu_custom_call.1} parent=1 // pred_check_branch
      %37 = sbr.rel (0) target = $region13
    $region12: #{tpu_custom_call.1} parent=1 // pred_region
      _
    $region13: #{tpu_custom_call.1} parent=1 // pred_fallthru
      _
    // Predicated region
    $region14: #{tpu_custom_call.1} parent=1 // pred_check
      _
    $region15: #{tpu_custom_call.1} parent=1 // pred_check_branch
      %39 = sbr.rel (0) target = $region17
    $region16: #{tpu_custom_call.1} parent=1 // pred_region
      _
    $region17: #{tpu_custom_call.1} parent=1 // pred_fallthru
      _
    // Predicated region
    $region18: #{tpu_custom_call.1} parent=1 // pred_check
      _
    $region19: #{tpu_custom_call.1} parent=1 // pred_check_branch
      %41 = sbr.rel (0) target = $region21
    $region20: #{tpu_custom_call.1} parent=1 // pred_region
      _
    $region21: #{tpu_custom_call.1} parent=1 // pred_fallthru
      _
    // Predicated region
    $region22: #{tpu_custom_call.1} parent=1 // pred_check
      _
    $region23: #{tpu_custom_call.1} parent=1 // pred_check_branch
      %43 = sbr.rel (0) target = $region25
    $region24: #{tpu_custom_call.1} parent=1 // pred_region
      %s45 = ssub.s32 512, 512
      %46 = vsyncadd [#allocation6], %s45
      %s47 = sshll.u32 [#allocation7], 4
      %s48 = int_to_ptr.vmem [resolvable:$true] %s47
      %53 = dma.hbm_to_vmem [thread:$0]  %s5, 512, %s48, [#allocation6], 128, 128, 8
    $region25: #{tpu_custom_call.1} parent=1 // pred_fallthru
      _
    // Predicated region
    $region26: #{tpu_custom_call.1} parent=1 // pred_check
      _
    $region27: #{tpu_custom_call.1} parent=1 // pred_check_branch
      %55 = sbr.rel (0) target = $region29
    $region28: #{tpu_custom_call.1} parent=1 // pred_region
      %56 = dma.done [#allocation3], 128
    $region29: #{tpu_custom_call.1} parent=1 // pred_fallthru
      _
    // Predicated region
    $region30: #{tpu_custom_call.1} parent=1 // pred_check
      _
    $region31: #{tpu_custom_call.1} parent=1 // pred_check_branch
      %58 = sbr.rel (0) target = $region33
    $region32: #{tpu_custom_call.1} parent=1 // pred_region
      %59 = dma.done [#allocation6], 512
    $region33: #{tpu_custom_call.1} parent=1 // pred_fallthru
      _
    // Predicated region
    $region34: #{tpu_custom_call.1} parent=1 // pred_check
      _
    $region35: #{tpu_custom_call.1} parent=1 // pred_check_branch
      %61 = sbr.rel (0) target = $region37
    $region36: #{tpu_custom_call.1} parent=1 // pred_region
      %62 = dma.done [#allocation6], 512
    $region37: #{tpu_custom_call.1} parent=1 // pred_fallthru
      _
    %v63 = vld [vmem:[#allocation2] sm:$0xff]
    %v64 = vld [vmem:[#allocation5] sm:$0xff]
    %v65 = vld [vmem:[#allocation5 + $0x8] sm:$0xff]
    %v66 = vld [vmem:[#allocation5 + $0x10] sm:$0xff]
    %v67 = vld [vmem:[#allocation5 + $0x18] sm:$0xff]
    %v68 = vld [vmem:[#allocation7] sm:$0x1]
    %v69 = vld [vmem:[#allocation7 + $0x1] sm:$0x1]
    %v70 = vld [vmem:[#allocation7 + $0x2] sm:$0x1]
    %v71 = vlaneseq
    %v72 = vshrl.u32 %v71, 7
    %v73 = vsub.s32 0, %v72
    %v74 = vrot.slane %v68, %v73
    %vm75 = vcmask 261120
    %v77 = vsel %vm75, %v63, 0
    %79 = vmatprep.subr.mxu0 0.0
    %80 = vmatpush1.msra.mxu0 %v64
    %81 = vmatprep.subr.mxu0 0.0
    %82 = vmatpush1.msra.mxu0 %v65
    %83 = vmatprep.subr.mxu0 0.0
    %84 = vmatpush1.msra.mxu0 %v66
    %85 = vmatprep.subr.mxu0 0.0
    %86 = vmatpush1.msra.mxu0 %v67
    %87 = vmatprep.subr.mxu0 0.0
    %88 = vmatpush1.msra.mxu0 0.0
    %89 = vmatprep.subr.mxu0 0.0
    %90 = vmatpush1.msra.mxu0 0.0
    %91 = vmatprep.subr.mxu0 0.0
    %92 = vmatpush1.msra.mxu0 0.0
    %93 = vmatprep.subr.mxu0 0.0
    %94 = vmatpush1.msra.mxu0 0.0
    %95 = vmatprep.subr.mxu0 0.0
    %96 = vmatpush1.msra.mxu0 0.0
    %97 = vmatprep.subr.mxu0 0.0
    %98 = vmatpush1.msra.mxu0 0.0
    %99 = vmatprep.subr.mxu0 0.0
    %100 = vmatpush1.msra.mxu0 0.0
    %101 = vmatprep.subr.mxu0 0.0
    %102 = vmatpush1.msra.mxu0 0.0
    %103 = vmatprep.subr.mxu0 0.0
    %104 = vmatpush1.msra.mxu0 0.0
    %105 = vmatprep.subr.mxu0 0.0
    %106 = vmatpush1.msra.mxu0 0.0
    %107 = vmatprep.subr.mxu0 0.0
    %108 = vmatpush1.msra.mxu0 0.0
    %109 = vmatprep.subr.mxu0 0.0
    %110 = vmatpush1.msra.mxu0 0.0
    %111 = vmatprep.subr.mxu0 0.0
    %112 = vmatpush1.msra.mxu0 0.0
    %113 = vmatprep.subr.mxu0 0.0
    %114 = vmatpush1.msra.mxu0 0.0
    %115 = vmatprep.subr.mxu0 0.0
    %116 = vmatpush1.msra.mxu0 0.0
    %117 = vmatprep.subr.mxu0 0.0
    %118 = vmatpush1.msra.mxu0 0.0
    %119 = vmatprep.subr.mxu0 0.0
    %120 = vmatpush1.msra.mxu0 0.0
    %121 = vmatprep.subr.mxu0 0.0
    %122 = vmatpush1.msra.mxu0 0.0
    %123 = vmatprep.subr.mxu0 0.0
    %124 = vmatpush1.msra.mxu0 0.0
    %125 = vmatprep.subr.mxu0 0.0
    %126 = vmatpush1.msra.mxu0 0.0
    %127 = vmatprep.subr.mxu0 0.0
    %128 = vmatpush1.msra.mxu0 0.0
    %129 = vmatprep.subr.mxu0 0.0
    %130 = vmatpush1.msra.mxu0 0.0
    %131 = vmatprep.subr.mxu0 0.0
    %132 = vmatpush1.msra.mxu0 0.0
    %133 = vmatprep.subr.mxu0 0.0
    %134 = vmatpush1.msra.mxu0 0.0
    %135 = vmatprep.subr.mxu0 0.0
    %136 = vmatpush1.msra.mxu0 0.0
    %137 = vmatprep.subr.mxu0 0.0
    %138 = vmatpush1.msra.mxu0 0.0
    %139 = vmatprep.subr.mxu0 0.0
    %140 = vmatpush1.msra.mxu0 0.0
    %141 = vmatprep.subr.mxu0 0.0
    %142 = vmatpush1.msra.mxu0 0.0
    %143 = vmatprep.mubr.f32.mxu0 0.0
    %144 = vmatmul.mubr.f32.gmra.mrb[0].mxu0 %v77
    %v145 = vpop.f32.mrb[0].mxu0
    %v146 = vadd.f32 %v74, %v145
    %v147 = vpop.f32.mrb[0].mxu0
    %148 = vdwg.mxu0
    %149 = vadd.xlane.f32.xlu0 %v146
    %v150 = vpop.xlane.xlu0 %149
    %v151 = vrcp.pop 128.0
    %v152 = vmul.f32 %v150, %v151
    %v153 = vmul.f32 %v146, %v146
    %154 = vadd.xlane.f32.xlu0 %v153
    %v155 = vpop.xlane.xlu0 %154
    %v156 = vmul.f32 %v155, %v151
    %v157 = vmul.f32 %v152, %v152
    %v158 = vsub.f32 %v156, %v157
    %v159 = vmax.f32 %v158, 0.0
    %v160 = vsub.f32 %v146, %v152
    %v161 = vadd.f32 %v159, 1e-05
    %v162 = vrsqrt.pop %v161
    %v163 = vmul.f32 %v160, %v162
    %v164 = vlaneseq
    %v165 = vshrl.u32 %v164, 7
    %v166 = vsub.s32 0, %v165
    %v167 = vrot.slane %v69, %v166
    %v168 = vmul.f32 %v163, %v167
    %v169 = vlaneseq
    %v170 = vshrl.u32 %v169, 7
    %v171 = vsub.s32 0, %v170
    %v172 = vrot.slane %v70, %v171
    %v173 = vadd.f32 %v168, %v172
    %v174 = vmax.f32 %v173, 0.0
    %v175 = vld [vmem:[%s2] sm:$0xff]
    %v176 = vld [vmem:[%s2 + $0x8] sm:$0xff]
    %v177 = vld [vmem:[%s2 + $0x10] sm:$0xff]
    %v178 = vld [vmem:[%s2 + $0x18] sm:$0xff]
    %v179 = vld [vmem:[%s2 + $0x20] sm:$0xff]
    %v180 = vld [vmem:[%s2 + $0x28] sm:$0xff]
    %v181 = vld [vmem:[%s2 + $0x30] sm:$0xff]
    %v182 = vld [vmem:[%s2 + $0x38] sm:$0xff]
    %v183 = vld [vmem:[%s2 + $0x40] sm:$0xff]
    %v184 = vld [vmem:[%s2 + $0x48] sm:$0xff]
    %v185 = vld [vmem:[%s2 + $0x50] sm:$0xff]
    %v186 = vld [vmem:[%s2 + $0x58] sm:$0xff]
    %v187 = vld [vmem:[%s2 + $0x60] sm:$0xff]
    %v188 = vld [vmem:[%s2 + $0x68] sm:$0xff]
    %v189 = vld [vmem:[%s2 + $0x70] sm:$0xff]
    %v190 = vld [vmem:[%s2 + $0x78] sm:$0xff]
    %v191 = vld [vmem:[#allocation7 + $0x8] sm:$0x1]
    %v192 = vld [vmem:[#allocation7 + $0x9] sm:$0x1]
    %v193 = vld [vmem:[#allocation7 + $0xa] sm:$0x1]
    %v194 = vlaneseq
    %v195 = vshrl.u32 %v194, 7
    %v196 = vsub.s32 0, %v195
    %v197 = vrot.slane %v191, %v196
    %198 = vmatprep.subr.mxu0 0.0
    %199 = vmatpush1.msra.mxu0 %v175
    %200 = vmatprep.subr.mxu0 0.0
    %201 = vmatpush1.msra.mxu0 %v176
    %202 = vmatprep.subr.mxu0 0.0
    %203 = vmatpush1.msra.mxu0 %v177
    %204 = vmatprep.subr.mxu0 0.0
    %205 = vmatpush1.msra.mxu0 %v178
    %206 = vmatprep.subr.mxu0 0.0
    %207 = vmatpush1.msra.mxu0 %v179
    %208 = vmatprep.subr.mxu0 0.0
    %209 = vmatpush1.msra.mxu0 %v180
    %210 = vmatprep.subr.mxu0 0.0
    %211 = vmatpush1.msra.mxu0 %v181
    %212 = vmatprep.subr.mxu0 0.0
    %213 = vmatpush1.msra.mxu0 %v182
    %214 = vmatprep.subr.mxu0 0.0
    %215 = vmatpush1.msra.mxu0 %v183
    %216 = vmatprep.subr.mxu0 0.0
    %217 = vmatpush1.msra.mxu0 %v184
    %218 = vmatprep.subr.mxu0 0.0
    %219 = vmatpush1.msra.mxu0 %v185
    %220 = vmatprep.subr.mxu0 0.0
    %221 = vmatpush1.msra.mxu0 %v186
    %222 = vmatprep.subr.mxu0 0.0
    %223 = vmatpush1.msra.mxu0 %v187
    %224 = vmatprep.subr.mxu0 0.0
    %225 = vmatpush1.msra.mxu0 %v188
    %226 = vmatprep.subr.mxu0 0.0
    %227 = vmatpush1.msra.mxu0 %v189
    %228 = vmatprep.subr.mxu0 0.0
    %229 = vmatpush1.msra.mxu0 %v190
    %230 = vmatprep.subr.mxu0 0.0
    %231 = vmatpush1.msra.mxu0 0.0
    %232 = vmatprep.subr.mxu0 0.0
    %233 = vmatpush1.msra.mxu0 0.0
    %234 = vmatprep.subr.mxu0 0.0
    %235 = vmatpush1.msra.mxu0 0.0
    %236 = vmatprep.subr.mxu0 0.0
    %237 = vmatpush1.msra.mxu0 0.0
    %238 = vmatprep.subr.mxu0 0.0
    %239 = vmatpush1.msra.mxu0 0.0
    %240 = vmatprep.subr.mxu0 0.0
    %241 = vmatpush1.msra.mxu0 0.0
    %242 = vmatprep.subr.mxu0 0.0
    %243 = vmatpush1.msra.mxu0 0.0
    %244 = vmatprep.subr.mxu0 0.0
    %245 = vmatpush1.msra.mxu0 0.0
    %246 = vmatprep.subr.mxu0 0.0
    %247 = vmatpush1.msra.mxu0 0.0
    %248 = vmatprep.subr.mxu0 0.0
    %249 = vmatpush1.msra.mxu0 0.0
    %250 = vmatprep.subr.mxu0 0.0
    %251 = vmatpush1.msra.mxu0 0.0
    %252 = vmatprep.subr.mxu0 0.0
    %253 = vmatpush1.msra.mxu0 0.0
    %254 = vmatprep.subr.mxu0 0.0
    %255 = vmatpush1.msra.mxu0 0.0
    %256 = vmatprep.subr.mxu0 0.0
    %257 = vmatpush1.msra.mxu0 0.0
    %258 = vmatprep.subr.mxu0 0.0
    %259 = vmatpush1.msra.mxu0 0.0
    %260 = vmatprep.subr.mxu0 0.0
    %261 = vmatpush1.msra.mxu0 0.0
    %262 = vmatprep.mubr.f32.mxu0 0.0
    %263 = vmatmul.mubr.f32.gmra.mrb[0].mxu0 %v174
    %v264 = vpop.f32.mrb[0].mxu0
    %v265 = vadd.f32 %v197, %v264
    %v266 = vpop.f32.mrb[0].mxu0
    %267 = vdwg.mxu0
    %268 = vadd.xlane.f32.xlu0 %v265
    %v269 = vpop.xlane.xlu0 %268
    %v270 = vmul.f32 %v269, %v151
    %v271 = vmul.f32 %v265, %v265
    %272 = vadd.xlane.f32.xlu0 %v271
    %v273 = vpop.xlane.xlu0 %272
    %v274 = vmul.f32 %v273, %v151
    %v275 = vmul.f32 %v270, %v270
    %v276 = vsub.f32 %v274, %v275
    %v277 = vmax.f32 %v276, 0.0
    %v278 = vsub.f32 %v265, %v270
    %v279 = vadd.f32 %v277, 1e-05
    %v280 = vrsqrt.pop %v279
    %v281 = vmul.f32 %v278, %v280
    %v282 = vlaneseq
    %v283 = vshrl.u32 %v282, 7
    %v284 = vsub.s32 0, %v283
    %v285 = vrot.slane %v192, %v284
    %v286 = vmul.f32 %v281, %v285
    %v287 = vlaneseq
    %v288 = vshrl.u32 %v287, 7
    %v289 = vsub.s32 0, %v288
    %v290 = vrot.slane %v193, %v289
    %v291 = vadd.f32 %v286, %v290
    %v292 = vmax.f32 %v291, 0.0
    %v293 = vld [vmem:[%s3] sm:$0xff]
    %v294 = vld [vmem:[%s3 + $0x8] sm:$0xff]
    %v295 = vld [vmem:[%s3 + $0x10] sm:$0xff]
    %v296 = vld [vmem:[%s3 + $0x18] sm:$0xff]
    %v297 = vld [vmem:[%s3 + $0x20] sm:$0xff]
    %v298 = vld [vmem:[%s3 + $0x28] sm:$0xff]
    %v299 = vld [vmem:[%s3 + $0x30] sm:$0xff]
    %v300 = vld [vmem:[%s3 + $0x38] sm:$0xff]
    %v301 = vld [vmem:[%s3 + $0x40] sm:$0xff]
    %v302 = vld [vmem:[%s3 + $0x48] sm:$0xff]
    %v303 = vld [vmem:[%s3 + $0x50] sm:$0xff]
    %v304 = vld [vmem:[%s3 + $0x58] sm:$0xff]
    %v305 = vld [vmem:[%s3 + $0x60] sm:$0xff]
    %v306 = vld [vmem:[%s3 + $0x68] sm:$0xff]
    %v307 = vld [vmem:[%s3 + $0x70] sm:$0xff]
    %v308 = vld [vmem:[%s3 + $0x78] sm:$0xff]
    %v309 = vld [vmem:[#allocation7 + $0x10] sm:$0x1]
    %v310 = vld [vmem:[#allocation7 + $0x11] sm:$0x1]
    %v311 = vld [vmem:[#allocation7 + $0x12] sm:$0x1]
    %v312 = vlaneseq
    %v313 = vshrl.u32 %v312, 7
    %v314 = vsub.s32 0, %v313
    %v315 = vrot.slane %v309, %v314
    %316 = vmatprep.subr.mxu0 0.0
    %317 = vmatpush1.msra.mxu0 %v293
    %318 = vmatprep.subr.mxu0 0.0
    %319 = vmatpush1.msra.mxu0 %v294
    %320 = vmatprep.subr.mxu0 0.0
    %321 = vmatpush1.msra.mxu0 %v295
    %322 = vmatprep.subr.mxu0 0.0
    %323 = vmatpush1.msra.mxu0 %v296
    %324 = vmatprep.subr.mxu0 0.0
    %325 = vmatpush1.msra.mxu0 %v297
    %326 = vmatprep.subr.mxu0 0.0
    %327 = vmatpush1.msra.mxu0 %v298
    %328 = vmatprep.subr.mxu0 0.0
    %329 = vmatpush1.msra.mxu0 %v299
    %330 = vmatprep.subr.mxu0 0.0
    %331 = vmatpush1.msra.mxu0 %v300
    %332 = vmatprep.subr.mxu0 0.0
    %333 = vmatpush1.msra.mxu0 %v301
    %334 = vmatprep.subr.mxu0 0.0
    %335 = vmatpush1.msra.mxu0 %v302
    %336 = vmatprep.subr.mxu0 0.0
    %337 = vmatpush1.msra.mxu0 %v303
    %338 = vmatprep.subr.mxu0 0.0
    %339 = vmatpush1.msra.mxu0 %v304
    %340 = vmatprep.subr.mxu0 0.0
    %341 = vmatpush1.msra.mxu0 %v305
    %342 = vmatprep.subr.mxu0 0.0
    %343 = vmatpush1.msra.mxu0 %v306
    %344 = vmatprep.subr.mxu0 0.0
    %345 = vmatpush1.msra.mxu0 %v307
    %346 = vmatprep.subr.mxu0 0.0
    %347 = vmatpush1.msra.mxu0 %v308
    %348 = vmatprep.subr.mxu0 0.0
    %349 = vmatpush1.msra.mxu0 0.0
    %350 = vmatprep.subr.mxu0 0.0
    %351 = vmatpush1.msra.mxu0 0.0
    %352 = vmatprep.subr.mxu0 0.0
    %353 = vmatpush1.msra.mxu0 0.0
    %354 = vmatprep.subr.mxu0 0.0
    %355 = vmatpush1.msra.mxu0 0.0
    %356 = vmatprep.subr.mxu0 0.0
    %357 = vmatpush1.msra.mxu0 0.0
    %358 = vmatprep.subr.mxu0 0.0
    %359 = vmatpush1.msra.mxu0 0.0
    %360 = vmatprep.subr.mxu0 0.0
    %361 = vmatpush1.msra.mxu0 0.0
    %362 = vmatprep.subr.mxu0 0.0
    %363 = vmatpush1.msra.mxu0 0.0
    %364 = vmatprep.subr.mxu0 0.0
    %365 = vmatpush1.msra.mxu0 0.0
    %366 = vmatprep.subr.mxu0 0.0
    %367 = vmatpush1.msra.mxu0 0.0
    %368 = vmatprep.subr.mxu0 0.0
    %369 = vmatpush1.msra.mxu0 0.0
    %370 = vmatprep.subr.mxu0 0.0
    %371 = vmatpush1.msra.mxu0 0.0
    %372 = vmatprep.subr.mxu0 0.0
    %373 = vmatpush1.msra.mxu0 0.0
    %374 = vmatprep.subr.mxu0 0.0
    %375 = vmatpush1.msra.mxu0 0.0
    %376 = vmatprep.subr.mxu0 0.0
    %377 = vmatpush1.msra.mxu0 0.0
    %378 = vmatprep.subr.mxu0 0.0
    %379 = vmatpush1.msra.mxu0 0.0
    %380 = vmatprep.mubr.f32.mxu0 0.0
    %381 = vmatmul.mubr.f32.gmra.mrb[0].mxu0 %v292
    %v382 = vpop.f32.mrb[0].mxu0
    %v383 = vadd.f32 %v315, %v382
    %v384 = vpop.f32.mrb[0].mxu0
    %385 = vdwg.mxu0
    %vm386 = vcmask 523264
    %v387 = vsel %vm386, %v383, 0.0
    %388 = vadd.xlane.f32.xlu0 %v387
    %v389 = vpop.xlane.xlu0 %388
    %v390 = vrcp.pop 64.0
    %v391 = vmul.f32 %v389, %v390
    %v392 = vmul.f32 %v383, %v383
    %v393 = vsel %vm386, %v392, 0.0
    %394 = vadd.xlane.f32.xlu0 %v393
    %v395 = vpop.xlane.xlu0 %394
    %v396 = vmul.f32 %v395, %v390
    %v397 = vmul.f32 %v391, %v391
    %v398 = vsub.f32 %v396, %v397
    %v399 = vmax.f32 %v398, 0.0
    %v400 = vsub.f32 %v383, %v391
    %v401 = vadd.f32 %v399, 1e-05
    %v402 = vrsqrt.pop %v401
    %v403 = vmul.f32 %v400, %v402
    %v404 = vlaneseq
    %v405 = vshrl.u32 %v404, 7
    %v406 = vsub.s32 0, %v405
    %v407 = vrot.slane %v310, %v406
    %v408 = vmul.f32 %v403, %v407
    %v409 = vlaneseq
    %v410 = vshrl.u32 %v409, 7
    %v411 = vsub.s32 0, %v410
    %v412 = vrot.slane %v311, %v411
    %v413 = vadd.f32 %v408, %v412
    %v414 = vmax.f32 %v413, 0.0
    %v415 = vld [vmem:[#allocation7 + $0x18] sm:$0x1]
    %v416 = vld [vmem:[%s4] sm:$0xff]
    %v417 = vld [vmem:[%s4 + $0x8] sm:$0xff]
    %v418 = vld [vmem:[%s4 + $0x10] sm:$0xff]
    %v419 = vld [vmem:[%s4 + $0x18] sm:$0xff]
    %v420 = vld [vmem:[%s4 + $0x20] sm:$0xff]
    %v421 = vld [vmem:[%s4 + $0x28] sm:$0xff]
    %v422 = vld [vmem:[%s4 + $0x30] sm:$0xff]
    %v423 = vld [vmem:[%s4 + $0x38] sm:$0xff]
    %v424 = vlaneseq
    %v425 = vshrl.u32 %v424, 7
    %v426 = vsub.s32 0, %v425
    %v427 = vrot.slane %v415, %v426
    %v429 = vsel %vm386, %v414, 0
    %431 = vmatprep.subr.mxu0 0.0
    %432 = vmatpush1.msra.mxu0 %v416
    %433 = vmatprep.subr.mxu0 0.0
    %434 = vmatpush1.msra.mxu0 %v417
    %435 = vmatprep.subr.mxu0 0.0
    %436 = vmatpush1.msra.mxu0 %v418
    %437 = vmatprep.subr.mxu0 0.0
    %438 = vmatpush1.msra.mxu0 %v419
    %439 = vmatprep.subr.mxu0 0.0
    %440 = vmatpush1.msra.mxu0 %v420
    %441 = vmatprep.subr.mxu0 0.0
    %442 = vmatpush1.msra.mxu0 %v421
    %443 = vmatprep.subr.mxu0 0.0
    %444 = vmatpush1.msra.mxu0 %v422
    %445 = vmatprep.subr.mxu0 0.0
    %446 = vmatpush1.msra.mxu0 %v423
    %447 = vmatprep.subr.mxu0 0.0
    %448 = vmatpush1.msra.mxu0 0.0
    %449 = vmatprep.subr.mxu0 0.0
    %450 = vmatpush1.msra.mxu0 0.0
    %451 = vmatprep.subr.mxu0 0.0
    %452 = vmatpush1.msra.mxu0 0.0
    %453 = vmatprep.subr.mxu0 0.0
    %454 = vmatpush1.msra.mxu0 0.0
    %455 = vmatprep.subr.mxu0 0.0
    %456 = vmatpush1.msra.mxu0 0.0
    %457 = vmatprep.subr.mxu0 0.0
    %458 = vmatpush1.msra.mxu0 0.0
    %459 = vmatprep.subr.mxu0 0.0
    %460 = vmatpush1.msra.mxu0 0.0
    %461 = vmatprep.subr.mxu0 0.0
    %462 = vmatpush1.msra.mxu0 0.0
    %463 = vmatprep.subr.mxu0 0.0
    %464 = vmatpush1.msra.mxu0 0.0
    %465 = vmatprep.subr.mxu0 0.0
    %466 = vmatpush1.msra.mxu0 0.0
    %467 = vmatprep.subr.mxu0 0.0
    %468 = vmatpush1.msra.mxu0 0.0
    %469 = vmatprep.subr.mxu0 0.0
    %470 = vmatpush1.msra.mxu0 0.0
    %471 = vmatprep.subr.mxu0 0.0
    %472 = vmatpush1.msra.mxu0 0.0
    %473 = vmatprep.subr.mxu0 0.0
    %474 = vmatpush1.msra.mxu0 0.0
    %475 = vmatprep.subr.mxu0 0.0
    %476 = vmatpush1.msra.mxu0 0.0
    %477 = vmatprep.subr.mxu0 0.0
    %478 = vmatpush1.msra.mxu0 0.0
    %479 = vmatprep.subr.mxu0 0.0
    %480 = vmatpush1.msra.mxu0 0.0
    %481 = vmatprep.subr.mxu0 0.0
    %482 = vmatpush1.msra.mxu0 0.0
    %483 = vmatprep.subr.mxu0 0.0
    %484 = vmatpush1.msra.mxu0 0.0
    %485 = vmatprep.subr.mxu0 0.0
    %486 = vmatpush1.msra.mxu0 0.0
    %487 = vmatprep.subr.mxu0 0.0
    %488 = vmatpush1.msra.mxu0 0.0
    %489 = vmatprep.subr.mxu0 0.0
    %490 = vmatpush1.msra.mxu0 0.0
    %491 = vmatprep.subr.mxu0 0.0
    %492 = vmatpush1.msra.mxu0 0.0
    %493 = vmatprep.subr.mxu0 0.0
    %494 = vmatpush1.msra.mxu0 0.0
    %495 = vmatprep.mubr.f32.mxu0 0.0
    %496 = vmatmul.mubr.f32.gmra.mrb[0].mxu0 %v429
    %v497 = vpop.f32.mrb[0].mxu0
    %v498 = vadd.f32 %v427, %v497
    %v499 = vpop.f32.mrb[0].mxu0
    %500 = vdwg.mxu0
    %v501 = vlaneseq
    %v502 = vand.u32 %v501, 127
    %vm503 = vcmp.ge.s32.totalorder %v502, 4
    %vm504 = vcmp.lt.s32.totalorder %v502, 8
    %vm505 = vmand %vm503, %vm504
    %v506 = vmax.f32 %v498, -10.0
    %v507 = vmin.f32 %v506, 2.0
    %v508 = vsel %vm505, %v507, %v498
    %509 = vst [vmem:[#allocation8] sm:$0xff] %v508
    // Predicated region
    $region38: #{tpu_custom_call.1} parent=1 // pred_check
      _
    $region39: #{tpu_custom_call.1} parent=1 // pred_check_branch
      %511 = sbr.rel (0) target = $region41
    $region40: #{tpu_custom_call.1} parent=1 // pred_region
      %s513 = ssub.s32 128, 128
      %514 = vsyncadd [#allocation4], %s513
      %s516 = sshll.u32 [#allocation8], 4
      %s517 = int_to_ptr.vmem [resolvable:$true] %s516
      %519 = dma.vmem_to_hbm [thread:$0]  %s517, 128, %s6, [#allocation4]
    $region41: #{tpu_custom_call.1} parent=1 // pred_fallthru
      _
    // Predicated region
    $region42: #{tpu_custom_call.1} parent=1 // pred_check
      _
    $region43: #{tpu_custom_call.1} parent=1 // pred_check_branch
      %521 = sbr.rel (0) target = $region45
    $region44: #{tpu_custom_call.1} parent=1 // pred_region
      %522 = dma.done [#allocation4], 128
    $region45: #{tpu_custom_call.1} parent=1 // pred_fallthru
      _
    %523 = vsyncpa [#allocation3], 1
    %524 = vsyncpa [#allocation6], 1
    %525 = vsyncpa [#allocation4], 1

</llo_original>
